<compile_context>
chip_gen: v7x
topology: tpu7x:2x2x1
jax: 0.10.0
libtpu: 0.0.40
codegen_flags: <defaults>
</compile_context>

<pallas_src>
import jax
import jax.numpy as jnp
from jax.experimental import pallas as pl
from jax.experimental.pallas import tpu as pltpu

_LANES = 128                          # vreg lane width — last dim of the slab
_TARGET_TILE_BYTES = 2 * 1024 * 1024  # ~2 MiB/buffer -> near HBM roofline
_SMALL_FALLBACK_ELEMS = 65536         # below this, pallas_call overhead dominates


def _round_up(a: int, b: int) -> int:
    return -(-a // b) * b


def _add_one_kernel(x_ref, o_ref):
    # Elementwise hot path on a lane-dense VMEM tile (full, unmasked vst).
    o_ref[...] = x_ref[...] + jnp.asarray(1, dtype=x_ref.dtype)


def _add_one_pallas_slab(slab):
    """slab: [rows, 128] lane-dense 2D view of the input (no copies made)."""
    rows, width = slab.shape
    itemsize = jnp.dtype(slab.dtype).itemsize

    # ~2 MiB per buffer, rows a multiple of 8 (sublane-aligned).
    tm = max(8, (_TARGET_TILE_BYTES // (width * itemsize)) // 8 * 8)
    # Make sure both v7x TensorCores get work (>= 2 grid steps); no cost on
    # single-TC v5e/v6e.
    if pl.cdiv(rows, tm) < 2:
        tm = max(8, _round_up(pl.cdiv(rows, 2), 8))

    grid = (pl.cdiv(rows, tm),)  # ragged final block is masked by Pallas

    return pl.pallas_call(
        _add_one_kernel,
        out_shape=jax.ShapeDtypeStruct((rows, width), slab.dtype),
        grid=grid,
        in_specs=[pl.BlockSpec((tm, width), lambda i: (i, 0))],
        out_specs=pl.BlockSpec((tm, width), lambda i: (i, 0)),
        compiler_params=pltpu.CompilerParams(
            # Shards the row-tile axis across both v7x TensorCores.
            dimension_semantics=("parallel",),
            # 4 buffers x ~2 MiB = ~8 MiB; 32 MiB limit is safe on v5e/v6e/v7x.
            vmem_limit_bytes=32 * 1024 * 1024,
        ),
    )(slab)


def model_test_forward(x, params=None, *, use_pallas=True):
    """Mirrors ModelTest.forward: returns x + 1.

    `params` (the unused nn.Linear(10, 5) weight/bias) is accepted for parity
    with the PyTorch module but, exactly like the reference forward, unused.
    """
    del params  # nn.Linear is initialized but never applied in forward().
    n = x.size

    if (not use_pallas) or n < _SMALL_FALLBACK_ELEMS or (n % _LANES != 0):
        # Tiny inputs: the ~0.35us pallas_call launch dwarfs the work.
        # Ragged sizes: a lane-dense repack would roughly triple HBM traffic
        # on a bandwidth-bound op, so the fused XLA add is at least as fast.
        return x + jnp.asarray(1, x.dtype)

    # Free reshape (contiguous, linearization-preserving) into a lane-dense
    # [rows, 128] slab; no padding, no output slice.
    slab = x.reshape(n // _LANES, _LANES)
    out = _add_one_pallas_slab(slab)
    return out.reshape(x.shape)


def init_params(key):
    # Deterministic init matching nn.Linear(10, 5): weight [5, 10], bias [5].
    kw, kb = jax.random.split(key)
    bound = 1.0 / jnp.sqrt(10.0)
    weight = jax.random.uniform(kw, (5, 10), jnp.float32, -bound, bound)
    bias = jax.random.uniform(kb, (5,), jnp.float32, -bound, bound)
    return {"linear_weight": weight, "linear_bias": bias}


if __name__ == "__main__":
    key = jax.random.PRNGKey(0)
    k_param, k_small, k_big, k_flat = jax.random.split(key, 4)

    params = init_params(k_param)

    # Small input consistent with the module (last dim 10, matching the
    # declared-but-unused Linear(10, 5)). Auto-routes to the XLA fallback.
    x = jax.random.normal(k_small, (8, 10), dtype=jnp.float32)
    out = jax.block_until_ready(model_test_forward(x, params))
    assert out.shape == x.shape and out.dtype == x.dtype
    assert jnp.allclose(out, x + 1.0, atol=1e-6)

    # Lane-aligned last dim (384 = 3*128): exercises the no-copy Pallas path
    # with a multi-step grid and a ragged final block.
    x_big = jax.random.normal(k_big, (257, 384), dtype=jnp.float32)
    out_big = jax.block_until_ready(model_test_forward(x_big, params))
    assert out_big.shape == x_big.shape and out_big.dtype == x_big.dtype
    assert jnp.allclose(out_big, x_big + 1.0, atol=1e-6)

    # Last dim NOT a multiple of 128 but total size is: exercises the flat
    # [n//128, 128] reshape path (still no copies).
    x_flat = jax.random.normal(k_flat, (1024, 96), dtype=jnp.float32)
    out_flat = jax.block_until_ready(model_test_forward(x_flat, params))
    assert out_flat.shape == x_flat.shape and out_flat.dtype == x_flat.dtype
    assert jnp.allclose(out_flat, x_flat + 1.0, atol=1e-6)

    print("KERNEL_OK")
</pallas_src>

<mosaic_0001>
module attributes {stable_mosaic.version = 11 : i64} {
  func.func @_add_one_kernel(%arg0: i32, %arg1: memref<392x128xf32, #tpu.memory_space<vmem>>, %arg2: memref<392x128xf32, #tpu.memory_space<vmem>>) attributes {dimension_semantics = [#tpu.dimension_semantics<parallel>], iteration_bounds = array<i64: 2>, scalar_prefetch = 0 : i64, scratch_operands = 0 : i64, tpu.core_type = #tpu.core_type<tc>, window_params = [{transform_indices = @transform_0, window_bounds = array<i64: 392, 128>}, {transform_indices = @transform_1, window_bounds = array<i64: 392, 128>}]} {
    %c0 = arith.constant 0 : index
    %c0_0 = arith.constant 0 : index
    %0 = vector.load %arg1[%c0, %c0_0] : memref<392x128xf32, #tpu.memory_space<vmem>>, vector<392x128xf32>
    %cst = arith.constant 1.000000e+00 : f32
    %1 = vector.broadcast %cst : f32 to vector<392x128xf32>
    %2 = arith.addf %0, %1 : vector<392x128xf32>
    %c0_1 = arith.constant 0 : index
    %c0_2 = arith.constant 0 : index
    %3 = vector.load %arg2[%c0_1, %c0_2] : memref<392x128xf32, #tpu.memory_space<vmem>>, vector<392x128xf32>
    tpu.vector_store %arg2[%c0_1, %c0_2], %2 {strides = array<i32>} : memref<392x128xf32, #tpu.memory_space<vmem>>, vector<392x128xf32>,
    return
  }
  func.func @transform_0(%arg0: i32) -> (i32, i32) {
    %c0_i32 = arith.constant 0 : i32
    %c0_i32_0 = arith.constant 0 : i32
    return %arg0, %c0_i32 : i32, i32
  }
  func.func @transform_1(%arg0: i32) -> (i32, i32) {
    %c0_i32 = arith.constant 0 : i32
    %c0_i32_0 = arith.constant 0 : i32
    return %arg0, %c0_i32 : i32, i32
  }
}

</mosaic_0001>

<llo_original>
// kernel: tpu_custom_call.1
$region0: #{tpu_custom_call.1}
  #allocation0 [shape = 'u32[]', space=smem, size = 0x4, offset = 0x4, fixed_abs, tag = 'smem constant byte address 0x4 - core index']
  #allocation1 [shape = 'u32[144,128]{1,0:T(1,128)}', space=vmem, size = 0x12000, scoped, tag = 'internal scratch']
  %s0 = inlined_call_operand.hbm [shape: f32[771,128], index: 0, kind: input, shape index: {}]
  %s1 = inlined_call_operand.hbm [shape: f32[771,128], index: 1, kind: output, shape index: {}]
  %s2 = sld [smem:[#allocation0]]
  $region41: #{tpu_custom_call.1} parent=0
    _
  %s4 = ssub.s32 1, %s2
  %s5 = scalar_select 0, %s4, %s2
  $region1: #{tpu_custom_call.1} parent=0
    #allocation2 [shape = 'u8[401408]{0}', space=vmem, size = 0x62000, scoped, tag = 'input window, operand 0']
    #allocation3 [shape = 's32[2]{0}', space=sflag, size = 0x8, scoped, tag = 'scoped memory for tpu_custom_call.1']
    #allocation4 [shape = 's32[2]{0}', space=sflag, size = 0x8, scoped, tag = 'scoped memory for tpu_custom_call.1']
    #allocation5 [shape = 'u8[401408]{0}', space=vmem, size = 0x62000, scoped, tag = 'output window, operand 0']
    %6 = vsyncpa [#allocation3], 0
    %s7 = scalar_lea.sflag [#allocation3], 1
    %8 = vsyncpa %s7, 0
    %9 = vsyncpa [#allocation4], 0
    %s10 = scalar_lea.sflag [#allocation4], 1
    %11 = vsyncpa %s10, 0
    loop: start=0, step=1, limit=4
    $region2: #{tpu_custom_call.1} parent=1 // loop_pre_header
      _
    $region3: #{tpu_custom_call.1} parent=1 // loop_header
      %s13 = sphi 0, %s17
      %p14 = scmp.ge.s32.totalorder %s13, 4
      %s23 = sphi 0, %s25
      %s26 = sphi 0, %s23
      %s27 = sphi 0, %s26
      %s43 = sphi 0, %s27
      %s49 = sphi 0, %s51
      %s52 = sphi 0, %s49
      %s53 = sphi 0, %s52
      %s69 = sphi 0, %s53
    $region4: #{tpu_custom_call.1} parent=1 // loop_header_branch
      %16 = sbr.rel (%p14) target = $region8
    $region5: #{tpu_custom_call.1} parent=1 // loop_body
      %s18 = ssub.s32 %s13, 1
      %s19 = ssub.s32 %s13, 2
      %s20 = sadd.s32 %s13, 1
      %s21 = ssub.s32 %s13, %s20
      %p22 = scmp.eq.s32.totalorder %s21, 0
      %s24 = sadd.s32 %s23, 1
      %s25 = scalar_select %p22, %s23, %s24
      %p28 = pneg %p22
      %p29 = scmp.eq.s32.totalorder %s13, 1
      %p30 = por %p28, %p29
      %p31 = scmp.ne.s32.totalorder %s23, %s26
      %p32 = scmp.eq.s32.totalorder %s13, 0
      %p33 = por %p31, %p32
      %p34 = scmp.ne.s32.totalorder %s23, %s26
      %p35 = scmp.eq.s32.totalorder %s18, 1
      %p36 = por %p34, %p35
      %p37 = scmp.ne.s32.totalorder %s26, %s27
      %p38 = scmp.eq.s32.totalorder %s18, 0
      %p39 = por %p37, %p38
      %p40 = scmp.ne.s32.totalorder %s26, %s27
      %p41 = scmp.eq.s32.totalorder %s19, 1
      %p42 = por %p40, %p41
      %p44 = scmp.ne.s32.totalorder %s27, %s43
      %p45 = scmp.eq.s32.totalorder %s19, 0
      %p46 = por %p44, %p45
      %s47 = ssub.s32 %s13, %s20
      %p48 = scmp.eq.s32.totalorder %s47, 0
      %s50 = sadd.s32 %s49, 1
      %s51 = scalar_select %p48, %s49, %s50
      %p54 = pneg %p48
      %p55 = scmp.eq.s32.totalorder %s13, 1
      %p56 = por %p54, %p55
      %p57 = scmp.ne.s32.totalorder %s49, %s52
      %p58 = scmp.eq.s32.totalorder %s13, 0
      %p59 = por %p57, %p58
      %p60 = scmp.ne.s32.totalorder %s49, %s52
      %p61 = scmp.eq.s32.totalorder %s18, 1
      %p62 = por %p60, %p61
      %p63 = scmp.ne.s32.totalorder %s52, %s53
      %p64 = scmp.eq.s32.totalorder %s18, 0
      %p65 = por %p63, %p64
      %p66 = scmp.ne.s32.totalorder %s52, %s53
      %p67 = scmp.eq.s32.totalorder %s19, 1
      %p68 = por %p66, %p67
      %p70 = scmp.ne.s32.totalorder %s53, %s69
      %p71 = scmp.eq.s32.totalorder %s19, 0
      %p72 = por %p70, %p71
      %p73 = scmp.le.s32.totalorder 1, %s13
      %p74 = scmp.lt.s32.totalorder %s13, 3
      %p75 = pnand %p73, %p74
      %p76 = pneg %p75
      // Predicated region
      $region9: #{tpu_custom_call.1} parent=5 // pred_check
        _
      $region10: #{tpu_custom_call.1} parent=5 // pred_check_branch
        %78 = sbr.rel (%p75) target = $region12
      $region11: #{tpu_custom_call.1} parent=5 // pred_region
        %s79 = ssub.s32 %s13, 1
      $region12: #{tpu_custom_call.1} parent=5 // pred_fallthru
        _
      %p80 = scmp.lt.s32.totalorder %s13, 2
      // Predicated region
      $region13: #{tpu_custom_call.1} parent=5 // pred_check
        %p81 = pneg %p80
      $region14: #{tpu_custom_call.1} parent=5 // pred_check_branch
        %83 = sbr.rel (%p81) target = $region16
      $region15: #{tpu_custom_call.1} parent=5 // pred_region
        // Predicated region
        $region17: #{tpu_custom_call.1} parent=15 // pred_check
          %p84 = pneg %p33
        $region18: #{tpu_custom_call.1} parent=15 // pred_check_branch
          %86 = sbr.rel (%p84) target = $region20
        $region19: #{tpu_custom_call.1} parent=15 // pred_region
          %s87 = sand.u32 %s23, 1
          %s88 = scalar_lea.sflag [#allocation3], %s87
          %s89 = sand.u32 %s23, 1
          %s90 = smul.addr %s89, 392
          %s91 = scalar_lea.vmem [#allocation2], %s90
          %s92 = smul.u32 49, %s13
          %s93 = ssub.s32 97, %s92
          %p94 = scmp.lt.s32.totalorder %s93, 49
          %s95 = scalar_select %p94, %s93, 49
          %s96 = smul.u32 128, %s95
          %s98 = ssub.s32 6272, %s96
          %99 = vsyncadd %s88, %s98
          %p100 = scmp.ne.s32.totalorder 0, %s96
          %s101 = smul.addr %s92, 128
          %s102 = scalar_lea.hbm %s0, %s101
          %s103 = smul.u32 8, %s95
          %s104 = sshll.u32 %s91, 4
          %s105 = int_to_ptr.vmem [resolvable:$true] %s104
          %s106 = sshll.u32 %s103, 4
          %110 = dma.hbm_to_vmem [thread:$0]  (%p100), %s102, %s106, %s105, %s88, 128, 128, 8
        $region20: #{tpu_custom_call.1} parent=15 // pred_fallthru
          _
      $region16: #{tpu_custom_call.1} parent=5 // pred_fallthru
        _
      %p111 = scmp.le.s32.totalorder 1, %s13
      %p112 = scmp.lt.s32.totalorder %s13, 3
      %p113 = pnand %p111, %p112
      %p114 = pneg %p113
      // Predicated region
      $region21: #{tpu_custom_call.1} parent=5 // pred_check
        _
      $region22: #{tpu_custom_call.1} parent=5 // pred_check_branch
        %116 = sbr.rel (%p113) target = $region24
      $region23: #{tpu_custom_call.1} parent=5 // pred_region
        %s117 = ssub.s32 %s13, 1
        %s118 = sand.u32 %s26, 1
        %s119 = scalar_lea.sflag [#allocation3], %s118
        %s120 = sand.u32 %s26, 1
        %s121 = smul.addr %s120, 392
        %s122 = scalar_lea.vmem [#allocation2], %s121
        // Predicated region
        $region25: #{tpu_custom_call.1} parent=23 // pred_check
          %p123 = pneg %p39
        $region26: #{tpu_custom_call.1} parent=23 // pred_check_branch
          %125 = sbr.rel (%p123) target = $region28
        $region27: #{tpu_custom_call.1} parent=23 // pred_region
          %126 = dma.done %s119, 6272
        $region28: #{tpu_custom_call.1} parent=23 // pred_fallthru
          _
        %s127 = sand.u32 %s26, 1
        %s128 = scalar_lea.sflag [#allocation3], %s127
        %s129 = sand.u32 %s26, 1
        %s130 = smul.addr %s129, 392
        %s131 = scalar_lea.vmem [#allocation2], %s130
        %p132 = pneg %p39
        %p133 = pneg %p36
        %p134 = pneg %p65
        %p135 = pneg %p62
        %s136 = sand.u32 %s52, 1
        %s137 = scalar_lea.sflag [#allocation4], %s136
        %s138 = sand.u32 %s52, 1
        %s139 = smul.addr %s138, 392
        %s140 = scalar_lea.vmem [#allocation5], %s139
        %s141 = smul.u32 49, %s18
        %s142 = ssub.s32 97, %s141
        %p143 = scmp.lt.s32.totalorder %s142, 49
        %s144 = scalar_select %p143, %s142, 49
        %s145 = smul.u32 128, %s144
        %s146 = smul.u32 49, %s18
        %s147 = ssub.s32 97, %s146
        %p148 = scmp.lt.s32.totalorder %s147, 49
        %s149 = scalar_select %p148, %s147, 49
        %s150 = smul.u32 128, %s149
        %v151 = vld [vmem:[%s122] sm:$0xff]
        %v152 = vld [vmem:[%s122 + $0x8] sm:$0xff]
        %v153 = vld [vmem:[%s122 + $0x10] sm:$0xff]
        %v154 = vld [vmem:[%s122 + $0x18] sm:$0xff]
        %v155 = vld [vmem:[%s122 + $0x20] sm:$0xff]
        %v156 = vld [vmem:[%s122 + $0x28] sm:$0xff]
        %v157 = vld [vmem:[%s122 + $0x30] sm:$0xff]
        %v158 = vld [vmem:[%s122 + $0x38] sm:$0xff]
        %v159 = vld [vmem:[%s122 + $0x40] sm:$0xff]
        %v160 = vld [vmem:[%s122 + $0x48] sm:$0xff]
        %v161 = vld [vmem:[%s122 + $0x50] sm:$0xff]
        %v162 = vld [vmem:[%s122 + $0x58] sm:$0xff]
        %v163 = vld [vmem:[%s122 + $0x60] sm:$0xff]
        %v164 = vld [vmem:[%s122 + $0x68] sm:$0xff]
        %v165 = vld [vmem:[%s122 + $0x70] sm:$0xff]
        %v166 = vld [vmem:[%s122 + $0x78] sm:$0xff]
        %v167 = vld [vmem:[%s122 + $0x80] sm:$0xff]
        %v168 = vld [vmem:[%s122 + $0x88] sm:$0xff]
        %v169 = vld [vmem:[%s122 + $0x90] sm:$0xff]
        %v170 = vld [vmem:[%s122 + $0x98] sm:$0xff]
        %v171 = vld [vmem:[%s122 + $0xa0] sm:$0xff]
        %v172 = vld [vmem:[%s122 + $0xa8] sm:$0xff]
        %v173 = vld [vmem:[%s122 + $0xb0] sm:$0xff]
        %v174 = vld [vmem:[%s122 + $0xb8] sm:$0xff]
        %v175 = vld [vmem:[%s122 + $0xc0] sm:$0xff]
        %v176 = vld [vmem:[%s122 + $0xc8] sm:$0xff]
        %v177 = vld [vmem:[%s122 + $0xd0] sm:$0xff]
        %v178 = vld [vmem:[%s122 + $0xd8] sm:$0xff]
        %v179 = vld [vmem:[%s122 + $0xe0] sm:$0xff]
        %v180 = vld [vmem:[%s122 + $0xe8] sm:$0xff]
        %v181 = vld [vmem:[%s122 + $0xf0] sm:$0xff]
        %v182 = vld [vmem:[%s122 + $0xf8] sm:$0xff]
        %v183 = vld [vmem:[%s122 + $0x100] sm:$0xff]
        %v184 = vld [vmem:[%s122 + $0x108] sm:$0xff]
        %v185 = vld [vmem:[%s122 + $0x110] sm:$0xff]
        %v186 = vld [vmem:[%s122 + $0x118] sm:$0xff]
        %v187 = vld [vmem:[%s122 + $0x120] sm:$0xff]
        %v188 = vld [vmem:[%s122 + $0x128] sm:$0xff]
        %v189 = vld [vmem:[%s122 + $0x130] sm:$0xff]
        %v190 = vld [vmem:[%s122 + $0x138] sm:$0xff]
        %v191 = vld [vmem:[%s122 + $0x140] sm:$0xff]
        %v192 = vld [vmem:[%s122 + $0x148] sm:$0xff]
        %v193 = vld [vmem:[%s122 + $0x150] sm:$0xff]
        %v194 = vld [vmem:[%s122 + $0x158] sm:$0xff]
        %v195 = vld [vmem:[%s122 + $0x160] sm:$0xff]
        %v196 = vld [vmem:[%s122 + $0x168] sm:$0xff]
        %v197 = vld [vmem:[%s122 + $0x170] sm:$0xff]
        %v198 = vld [vmem:[%s122 + $0x178] sm:$0xff]
        %v199 = vld [vmem:[%s122 + $0x180] sm:$0xff]
        %v200 = vadd.f32 %v151, 1.0
        %v201 = vadd.f32 %v152, 1.0
        %v202 = vadd.f32 %v153, 1.0
        %v203 = vadd.f32 %v154, 1.0
        %v204 = vadd.f32 %v155, 1.0
        %v205 = vadd.f32 %v156, 1.0
        %v206 = vadd.f32 %v157, 1.0
        %v207 = vadd.f32 %v158, 1.0
        %v208 = vadd.f32 %v159, 1.0
        %v209 = vadd.f32 %v160, 1.0
        %v210 = vadd.f32 %v161, 1.0
        %v211 = vadd.f32 %v162, 1.0
        %v212 = vadd.f32 %v163, 1.0
        %v213 = vadd.f32 %v164, 1.0
        %v214 = vadd.f32 %v165, 1.0
        %v215 = vadd.f32 %v166, 1.0
        %v216 = vadd.f32 %v167, 1.0
        %v217 = vadd.f32 %v168, 1.0
        %v218 = vadd.f32 %v169, 1.0
        %v219 = vadd.f32 %v170, 1.0
        %v220 = vadd.f32 %v171, 1.0
        %v221 = vadd.f32 %v172, 1.0
        %v222 = vadd.f32 %v173, 1.0
        %v223 = vadd.f32 %v174, 1.0
        %v224 = vadd.f32 %v175, 1.0
        %v225 = vadd.f32 %v176, 1.0
        %v226 = vadd.f32 %v177, 1.0
        %v227 = vadd.f32 %v178, 1.0
        %v228 = vadd.f32 %v179, 1.0
        %v229 = vadd.f32 %v180, 1.0
        %v230 = vadd.f32 %v181, 1.0
        %v231 = vadd.f32 %v182, 1.0
        %v232 = vadd.f32 %v183, 1.0
        %v233 = vadd.f32 %v184, 1.0
        %v234 = vadd.f32 %v185, 1.0
        %v235 = vadd.f32 %v186, 1.0
        %v236 = vadd.f32 %v187, 1.0
        %v237 = vadd.f32 %v188, 1.0
        %v238 = vadd.f32 %v189, 1.0
        %v239 = vadd.f32 %v190, 1.0
        %v240 = vadd.f32 %v191, 1.0
        %v241 = vadd.f32 %v192, 1.0
        %v242 = vadd.f32 %v193, 1.0
        %v243 = vadd.f32 %v194, 1.0
        %v244 = vadd.f32 %v195, 1.0
        %v245 = vadd.f32 %v196, 1.0
        %v246 = vadd.f32 %v197, 1.0
        %v247 = vadd.f32 %v198, 1.0
        %v248 = vadd.f32 %v199, 1.0
        %249 = vst [vmem:[%s140] sm:$0xff] %v200
        %250 = vst [vmem:[%s140 + $0x8] sm:$0xff] %v201
        %251 = vst [vmem:[%s140 + $0x10] sm:$0xff] %v202
        %252 = vst [vmem:[%s140 + $0x18] sm:$0xff] %v203
        %253 = vst [vmem:[%s140 + $0x20] sm:$0xff] %v204
        %254 = vst [vmem:[%s140 + $0x28] sm:$0xff] %v205
        %255 = vst [vmem:[%s140 + $0x30] sm:$0xff] %v206
        %256 = vst [vmem:[%s140 + $0x38] sm:$0xff] %v207
        %257 = vst [vmem:[%s140 + $0x40] sm:$0xff] %v208
        %258 = vst [vmem:[%s140 + $0x48] sm:$0xff] %v209
        %259 = vst [vmem:[%s140 + $0x50] sm:$0xff] %v210
        %260 = vst [vmem:[%s140 + $0x58] sm:$0xff] %v211
        %261 = vst [vmem:[%s140 + $0x60] sm:$0xff] %v212
        %262 = vst [vmem:[%s140 + $0x68] sm:$0xff] %v213
        %263 = vst [vmem:[%s140 + $0x70] sm:$0xff] %v214
        %264 = vst [vmem:[%s140 + $0x78] sm:$0xff] %v215
        %265 = vst [vmem:[%s140 + $0x80] sm:$0xff] %v216
        %266 = vst [vmem:[%s140 + $0x88] sm:$0xff] %v217
        %267 = vst [vmem:[%s140 + $0x90] sm:$0xff] %v218
        %268 = vst [vmem:[%s140 + $0x98] sm:$0xff] %v219
        %269 = vst [vmem:[%s140 + $0xa0] sm:$0xff] %v220
        %270 = vst [vmem:[%s140 + $0xa8] sm:$0xff] %v221
        %271 = vst [vmem:[%s140 + $0xb0] sm:$0xff] %v222
        %272 = vst [vmem:[%s140 + $0xb8] sm:$0xff] %v223
        %273 = vst [vmem:[%s140 + $0xc0] sm:$0xff] %v224
        %274 = vst [vmem:[%s140 + $0xc8] sm:$0xff] %v225
        %275 = vst [vmem:[%s140 + $0xd0] sm:$0xff] %v226
        %276 = vst [vmem:[%s140 + $0xd8] sm:$0xff] %v227
        %277 = vst [vmem:[%s140 + $0xe0] sm:$0xff] %v228
        %278 = vst [vmem:[%s140 + $0xe8] sm:$0xff] %v229
        %279 = vst [vmem:[%s140 + $0xf0] sm:$0xff] %v230
        %280 = vst [vmem:[%s140 + $0xf8] sm:$0xff] %v231
        %281 = vst [vmem:[%s140 + $0x100] sm:$0xff] %v232
        %282 = vst [vmem:[%s140 + $0x108] sm:$0xff] %v233
        %283 = vst [vmem:[%s140 + $0x110] sm:$0xff] %v234
        %284 = vst [vmem:[%s140 + $0x118] sm:$0xff] %v235
        %285 = vst [vmem:[%s140 + $0x120] sm:$0xff] %v236
        %286 = vst [vmem:[%s140 + $0x128] sm:$0xff] %v237
        %287 = vst [vmem:[%s140 + $0x130] sm:$0xff] %v238
        %288 = vst [vmem:[%s140 + $0x138] sm:$0xff] %v239
        %289 = vst [vmem:[%s140 + $0x140] sm:$0xff] %v240
        %290 = vst [vmem:[%s140 + $0x148] sm:$0xff] %v241
        %291 = vst [vmem:[%s140 + $0x150] sm:$0xff] %v242
        %292 = vst [vmem:[%s140 + $0x158] sm:$0xff] %v243
        %293 = vst [vmem:[%s140 + $0x160] sm:$0xff] %v244
        %294 = vst [vmem:[%s140 + $0x168] sm:$0xff] %v245
        %295 = vst [vmem:[%s140 + $0x170] sm:$0xff] %v246
        %296 = vst [vmem:[%s140 + $0x178] sm:$0xff] %v247
        %297 = vst [vmem:[%s140 + $0x180] sm:$0xff] %v248
        %s298 = sand.u32 %s52, 1
        %s299 = scalar_lea.sflag [#allocation4], %s298
        %s300 = sand.u32 %s52, 1
        %s301 = smul.addr %s300, 392
        %s302 = scalar_lea.vmem [#allocation5], %s301
        // Predicated region
        $region29: #{tpu_custom_call.1} parent=23 // pred_check
          %p303 = pneg %p62
        $region30: #{tpu_custom_call.1} parent=23 // pred_check_branch
          %305 = sbr.rel (%p303) target = $region32
        $region31: #{tpu_custom_call.1} parent=23 // pred_region
          %s306 = smul.u32 49, %s18
          %s307 = ssub.s32 97, %s306
          %p308 = scmp.lt.s32.totalorder %s307, 49
          %s309 = scalar_select %p308, %s307, 49
          %s310 = smul.u32 128, %s309
          %s312 = ssub.s32 6272, %s310
          %313 = vsyncadd %s299, %s312
          %p314 = scmp.ne.s32.totalorder 0, %s310
          %s315 = smul.addr %s306, 128
          %s316 = scalar_lea.hbm %s1, %s315
          %s317 = smul.u32 8, %s309
          %s318 = sshll.u32 %s302, 4
          %s319 = int_to_ptr.vmem [resolvable:$true] %s318
          %s320 = sshll.u32 %s317, 4
          %324 = dma.vmem_to_hbm [thread:$0]  (%p314), %s319, %s320, %s316, %s299, 128, 128, 8
        $region32: #{tpu_custom_call.1} parent=23 // pred_fallthru
          _
      $region24: #{tpu_custom_call.1} parent=5 // pred_fallthru
        _
      %p325 = scmp.le.s32.totalorder 2, %s13
      // Predicated region
      $region33: #{tpu_custom_call.1} parent=5 // pred_check
        %p326 = pneg %p325
      $region34: #{tpu_custom_call.1} parent=5 // pred_check_branch
        %328 = sbr.rel (%p326) target = $region36
      $region35: #{tpu_custom_call.1} parent=5 // pred_region
        %s329 = ssub.s32 %s13, 2
        // Predicated region
        $region37: #{tpu_custom_call.1} parent=35 // pred_check
          %p330 = pneg %p68
        $region38: #{tpu_custom_call.1} parent=35 // pred_check_branch
          %332 = sbr.rel (%p330) target = $region40
        $region39: #{tpu_custom_call.1} parent=35 // pred_region
          %s333 = sand.u32 %s53, 1
          %s334 = scalar_lea.sflag [#allocation4], %s333
          %s335 = sand.u32 %s53, 1
          %s336 = smul.addr %s335, 392
          %s337 = scalar_lea.vmem [#allocation5], %s336
          %338 = dma.done %s334, 6272
        $region40: #{tpu_custom_call.1} parent=35 // pred_fallthru
          _
      $region36: #{tpu_custom_call.1} parent=5 // pred_fallthru
        _
    $region6: #{tpu_custom_call.1} parent=1 // loop_footer
      %s17 = sadd.s32 1, %s13
    $region7: #{tpu_custom_call.1} parent=1 // loop_footer_branch
      %12 = sbr.rel target = $region3
    $region8: #{tpu_custom_call.1} parent=1 // loop_exit
      _
    %339 = vsyncpa [#allocation3], 1
    %s340 = scalar_lea.sflag [#allocation3], 1
    %341 = vsyncpa %s340, 1
    %342 = vsyncpa [#allocation4], 1
    %s343 = scalar_lea.sflag [#allocation4], 1
    %344 = vsyncpa %s343, 1

</llo_original>
